<compile_context>
chip_gen: v7x
topology: tpu7x:2x2x1
jax: 0.10.0
libtpu: 0.0.40
codegen_flags: <defaults>
</compile_context>

<pallas_src>
import functools

import numpy as np
import jax
import jax.numpy as jnp
from jax import lax
from jax.experimental import pallas as pl
from jax.experimental.pallas import tpu as pltpu

_LANES = 128
_SUBLANES = 8
_MIN_TILE = _LANES * _SUBLANES          # 1024 samples = one (8,128) f32 vreg


def _gaussian_soft_row(n_classes, std=0.5):
    # Reproduces stats.norm.pdf(range(n_classes), 0, std) — loc=0 for all rows
    # (same quirk as the reference implementation).
    xs = np.arange(n_classes, dtype=np.float64)
    pdf = np.exp(-(xs ** 2) / (2.0 * std ** 2)) / (std * np.sqrt(2.0 * np.pi))
    return pdf.astype(np.float32)


def _csr_loss_kernel(logits_ref, tgt_ref, out_ref, *, a0, a1, lb, n_valid,
                     tile_samples):
    """Fused per-tile loss partial sums, lane-dense over the batch.

    logits_ref : (2, TR, 128) class-major logits, batch on sublane/lane axes
    tgt_ref    : (TR, 128)    int32 targets in the same batch layout
    out_ref    : (8, 128)     f32 per-tile partial sums (tiny final sum in XLA)
    Constants a0, a1 are soft-label weights / B; lb = lambd / B.
    """
    i = pl.program_id(0)

    l0 = logits_ref[0].astype(jnp.float32)            # (TR, 128)
    l1 = logits_ref[1].astype(jnp.float32)
    d = l1 - l0

    # Binary softmax closed form (numerically stable):
    #   softplus(d) = max(d, 0) + log(1 + exp(-|d|))
    #   -log p0 = softplus(d)      -log p1 = softplus(d) - d
    #   p1 = exp(d - softplus(d)) = sigmoid(d),  p0 = 1 - p1
    sp = jnp.maximum(d, 0.0) + jnp.log(1.0 + jnp.exp(-jnp.abs(d)))
    p1 = jnp.exp(d - sp)

    # Cost-sensitive term for C == 2: M = [[0,1],[1,0]] (|t-c|**exp / max is
    # 0/1 for any exp), so cs_b = t*p0 + (1-t)*p1.
    t = tgt_ref[...].astype(jnp.float32)
    cs = t * (1.0 - p1) + (1.0 - t) * p1

    # Fused per-element contribution (base CE folded with soft-label constants):
    #   base_b / B = (a0 + a1) * softplus(d) - a1 * d
    combined = (a0 + a1) * sp - a1 * d + lb * cs

    # Mask padded batch entries (only the last tile can contain any).
    tr = d.shape[0]
    row = lax.broadcasted_iota(jnp.int32, (tr, _LANES), 0)
    lane = lax.broadcasted_iota(jnp.int32, (tr, _LANES), 1)
    gidx = i * tile_samples + row * _LANES + lane
    combined = jnp.where(gidx < n_valid, combined, 0.0)

    # Reduce TR rows -> 8 sublane rows: pure elementwise vreg adds (VPU only,
    # no cross-lane XLU work in the kernel).
    out_ref[...] = combined.reshape(tr // _SUBLANES, _SUBLANES, _LANES).sum(axis=0)


def _round_up(x, m):
    return (x + m - 1) // m * m


def cost_sensitive_regularized_loss(logits, target, *, n_classes, exp=2,
                                    lambd=10.0, std=0.5, tile_samples=8192):
    """CostSensitiveRegularizedLoss.forward with the module's default config
    (softmax normalization, 'mean' reduction, 'gls' base loss, lambd=10)."""
    # TODO(synk): only the defaults-consistent path (base_loss='gls',
    # normalization='softmax', reduction='mean') is implemented; the
    # 'ce'/'ls'/'focal_loss' and 'none'/'sum' branches are not.
    B, C = logits.shape
    assert C == n_classes == 2, "'gls' base loss hard-codes 2 classes"
    del exp  # for C == 2 the normalized cost matrix is exp-independent (0/1)

    soft = _gaussian_soft_row(2, std)
    a0 = float(soft[0]) / B
    a1 = float(soft[1]) / B
    lb = float(lambd) / B

    tb = min(_round_up(B, _MIN_TILE), _round_up(tile_samples, _MIN_TILE))
    b_pad = _round_up(B, tb)
    num_tiles = b_pad // tb
    tr = tb // _LANES
    r = b_pad // _LANES

    # Layout plumbing (single cheap XLA pass): (B, 2) -> class-major,
    # lane-dense (2, R, 128); logits keep their native dtype (bf16 stays bf16),
    # the f32 upcast happens inside the kernel.
    lt = jnp.pad(jnp.transpose(logits), ((0, 0), (0, b_pad - B)))
    lt = lt.reshape(2, r, _LANES)
    tt = jnp.pad(target.astype(jnp.int32), (0, b_pad - B)).reshape(r, _LANES)

    kernel = functools.partial(_csr_loss_kernel, a0=a0, a1=a1, lb=lb,
                               n_valid=B, tile_samples=tb)
    partials = pl.pallas_call(
        kernel,
        out_shape=jax.ShapeDtypeStruct((num_tiles * _SUBLANES, _LANES),
                                       jnp.float32),
        grid=(num_tiles,),
        in_specs=[
            pl.BlockSpec((2, tr, _LANES), lambda i: (0, i, 0)),   # logits
            pl.BlockSpec((tr, _LANES), lambda i: (i, 0)),         # targets
        ],
        out_specs=pl.BlockSpec((_SUBLANES, _LANES), lambda i: (i, 0)),
        compiler_params=pltpu.CompilerParams(
            dimension_semantics=("parallel",)),  # independent tiles -> megacore
    )(lt, tt)

    # Tiny epilogue: sum the (num_tiles*8, 128) partials and we're done
    # (1/B and lambd are already folded into the kernel constants).
    return jnp.sum(partials)


def _reference_loss(logits, target, *, n_classes, exp=2, lambd=10.0, std=0.5):
    # Pure-JAX mirror of the PyTorch forward (validation only).
    logp = jax.nn.log_softmax(logits, axis=1)
    soft = jnp.asarray(_gaussian_soft_row(n_classes, std))
    base = jnp.mean(jnp.sum(-logp * soft[None, :], axis=1))
    probs = jax.nn.softmax(logits, axis=1)
    x = jnp.abs(jnp.arange(n_classes, dtype=jnp.float32))
    M = jnp.abs(x[:, None] - x[None, :]) ** exp
    M = M / M.max()
    cs = jnp.mean(jnp.sum(M[target, :] * probs, axis=1))
    return base + lambd * cs


if __name__ == "__main__":
    n_classes = 2     # 'gls' base loss is only well-defined for 2 classes
    batch = 8
    key = jax.random.PRNGKey(0)
    k1, k2 = jax.random.split(key)
    logits = jax.random.normal(k1, (batch, n_classes), dtype=jnp.float32)
    target = jax.random.randint(k2, (batch,), 0, n_classes, dtype=jnp.int32)

    out = cost_sensitive_regularized_loss(logits, target, n_classes=n_classes,
                                          exp=2, lambd=10.0, std=0.5)
    out = jax.block_until_ready(out)

    ref = _reference_loss(logits, target, n_classes=n_classes,
                          exp=2, lambd=10.0, std=0.5)
    ref = jax.block_until_ready(ref)

    assert np.allclose(np.asarray(out), np.asarray(ref), rtol=1e-5, atol=1e-5), \
        f"mismatch: kernel={out} ref={ref}"
    print("KERNEL_OK")
</pallas_src>

<mosaic_0001>
module attributes {stable_mosaic.version = 11 : i64} {
  func.func @_csr_loss_kernel(%arg0: i32, %arg1: memref<2x8x128xf32, #tpu.memory_space<vmem>>, %arg2: memref<8x128xi32, #tpu.memory_space<vmem>>, %arg3: memref<8x128xf32, #tpu.memory_space<vmem>>) attributes {dimension_semantics = [#tpu.dimension_semantics<parallel>], iteration_bounds = array<i64: 1>, scalar_prefetch = 0 : i64, scratch_operands = 0 : i64, tpu.core_type = #tpu.core_type<tc>, window_params = [{transform_indices = @transform_0, window_bounds = array<i64: 2, 8, 128>}, {transform_indices = @transform_1, window_bounds = array<i64: 8, 128>}, {transform_indices = @transform_2, window_bounds = array<i64: 8, 128>}]} {
    %c0 = arith.constant 0 : index
    %c0_0 = arith.constant 0 : index
    %c0_1 = arith.constant 0 : index
    %0 = vector.load %arg1[%c0, %c0_0, %c0_1] : memref<2x8x128xf32, #tpu.memory_space<vmem>>, vector<1x8x128xf32>
    %1 = vector.shape_cast %0 : vector<1x8x128xf32> to vector<8x128xf32>
    %c1 = arith.constant 1 : index
    %c0_2 = arith.constant 0 : index
    %c0_3 = arith.constant 0 : index
    %2 = vector.load %arg1[%c1, %c0_2, %c0_3] : memref<2x8x128xf32, #tpu.memory_space<vmem>>, vector<1x8x128xf32>
    %3 = vector.shape_cast %2 : vector<1x8x128xf32> to vector<8x128xf32>
    %4 = arith.subf %3, %1 : vector<8x128xf32>
    %cst = arith.constant 0.000000e+00 : f32
    %5 = vector.broadcast %cst : f32 to vector<8x128xf32>
    %6 = arith.maximumf %4, %5 : vector<8x128xf32>
    %7 = math.absf %4 : vector<8x128xf32>
    %cst_4 = arith.constant 0.000000e+00 : f32
    %8 = vector.broadcast %cst_4 : f32 to vector<8x128xf32>
    %9 = arith.subf %8, %7 : vector<8x128xf32>
    %10 = math.exp %9 : vector<8x128xf32>
    %cst_5 = arith.constant 1.000000e+00 : f32
    %11 = vector.broadcast %cst_5 : f32 to vector<8x128xf32>
    %12 = arith.addf %11, %10 : vector<8x128xf32>
    %13 = math.log %12 : vector<8x128xf32>
    %14 = arith.addf %6, %13 : vector<8x128xf32>
    %15 = arith.subf %4, %14 : vector<8x128xf32>
    %16 = math.exp %15 : vector<8x128xf32>
    %c0_6 = arith.constant 0 : index
    %c0_7 = arith.constant 0 : index
    %17 = vector.load %arg2[%c0_6, %c0_7] : memref<8x128xi32, #tpu.memory_space<vmem>>, vector<8x128xi32>
    %18 = arith.sitofp %17 : vector<8x128xi32> to vector<8x128xf32>
    %cst_8 = arith.constant 1.000000e+00 : f32
    %19 = vector.broadcast %cst_8 : f32 to vector<8x128xf32>
    %20 = arith.subf %19, %16 : vector<8x128xf32>
    %21 = arith.mulf %18, %20 : vector<8x128xf32>
    %cst_9 = arith.constant 1.000000e+00 : f32
    %22 = vector.broadcast %cst_9 : f32 to vector<8x128xf32>
    %23 = arith.subf %22, %18 : vector<8x128xf32>
    %24 = arith.mulf %23, %16 : vector<8x128xf32>
    %25 = arith.addf %21, %24 : vector<8x128xf32>
    %cst_10 = arith.constant 0.113233313 : f32
    %26 = vector.broadcast %cst_10 : f32 to vector<8x128xf32>
    %27 = arith.mulf %26, %14 : vector<8x128xf32>
    %cst_11 = arith.constant 0.0134977419 : f32
    %28 = vector.broadcast %cst_11 : f32 to vector<8x128xf32>
    %29 = arith.mulf %28, %4 : vector<8x128xf32>
    %30 = arith.subf %27, %29 : vector<8x128xf32>
    %cst_12 = arith.constant 1.250000e+00 : f32
    %31 = vector.broadcast %cst_12 : f32 to vector<8x128xf32>
    %32 = arith.mulf %31, %25 : vector<8x128xf32>
    %33 = arith.addf %30, %32 : vector<8x128xf32>
    %34 = tpu.iota {dimensions = array<i32: 0>} : vector<8x128xi32>
    %35 = tpu.iota {dimensions = array<i32: 1>} : vector<8x128xi32>
    %c1024_i32 = arith.constant 1024 : i32
    %36 = arith.muli %arg0, %c1024_i32 : i32
    %c128_i32 = arith.constant 128 : i32
    %37 = vector.broadcast %c128_i32 : i32 to vector<8x128xi32>
    %38 = arith.muli %34, %37 : vector<8x128xi32>
    %39 = vector.broadcast %36 : i32 to vector<8x128xi32>
    %40 = arith.addi %39, %38 : vector<8x128xi32>
    %41 = arith.addi %40, %35 : vector<8x128xi32>
    %c8_i32 = arith.constant 8 : i32
    %42 = vector.broadcast %c8_i32 : i32 to vector<8x128xi32>
    %43 = arith.cmpi slt, %41, %42 : vector<8x128xi32>
    %cst_13 = arith.constant 0.000000e+00 : f32
    %44 = vector.broadcast %cst_13 : f32 to vector<8x128xf32>
    %45 = arith.select %43, %33, %44 : vector<8x128xi1>, vector<8x128xf32>
    %46 = vector.shape_cast %45 : vector<8x128xf32> to vector<1x8x128xf32>
    %cst_14 = arith.constant dense<0.000000e+00> : vector<8x128xf32>
    %47 = vector.multi_reduction <add>, %46, %cst_14 [0] : vector<1x8x128xf32> to vector<8x128xf32>
    %c0_15 = arith.constant 0 : index
    %c0_16 = arith.constant 0 : index
    %48 = vector.load %arg3[%c0_15, %c0_16] : memref<8x128xf32, #tpu.memory_space<vmem>>, vector<8x128xf32>
    tpu.vector_store %arg3[%c0_15, %c0_16], %47 {strides = array<i32>} : memref<8x128xf32, #tpu.memory_space<vmem>>, vector<8x128xf32>,
    return
  }
  func.func @transform_0(%arg0: i32) -> (i32, i32, i32) {
    %c0_i32 = arith.constant 0 : i32
    %c0_i32_0 = arith.constant 0 : i32
    %c0_i32_1 = arith.constant 0 : i32
    return %c0_i32, %arg0, %c0_i32_0 : i32, i32, i32
  }
  func.func @transform_1(%arg0: i32) -> (i32, i32) {
    %c0_i32 = arith.constant 0 : i32
    %c0_i32_0 = arith.constant 0 : i32
    return %arg0, %c0_i32 : i32, i32
  }
  func.func @transform_2(%arg0: i32) -> (i32, i32) {
    %c0_i32 = arith.constant 0 : i32
    %c0_i32_0 = arith.constant 0 : i32
    return %arg0, %c0_i32 : i32, i32
  }
}

</mosaic_0001>

<llo_original>
// kernel: tpu_custom_call.1
$region0: #{tpu_custom_call.1}
  #allocation0 [shape = 'u32[]', space=smem, size = 0x4, offset = 0x4, fixed_abs, tag = 'smem constant byte address 0x4 - core index']
  #allocation1 [shape = 'u32[144,128]{1,0:T(1,128)}', space=vmem, size = 0x12000, scoped, tag = 'internal scratch']
  %s0 = inlined_call_operand.hbm [shape: f32[2,8,128], index: 0, kind: input, shape index: {}]
  %s1 = inlined_call_operand.hbm [shape: s32[8,128], index: 1, kind: input, shape index: {}]
  %s2 = inlined_call_operand.hbm [shape: f32[8,128], index: 2, kind: output, shape index: {}]
  %s3 = sld [smem:[#allocation0]]
  $region26: #{tpu_custom_call.1} parent=0
    _
  %s5 = ssub.s32 1, %s3
  %s6 = scalar_select 0, %s5, %s3
  $region1: #{tpu_custom_call.1} parent=0
    #allocation2 [shape = 'u8[8192]{0}', space=vmem, size = 0x2000, scoped, tag = 'input window, operand 0, single buffered']
    #allocation3 [shape = 's32[1]{0}', space=sflag, size = 0x4, scoped, tag = 'scoped memory for tpu_custom_call.1']
    #allocation4 [shape = 's32[1]{0}', space=sflag, size = 0x4, scoped, tag = 'scoped memory for tpu_custom_call.1']
    #allocation5 [shape = 'u8[4096]{0}', space=vmem, size = 0x1000, scoped, tag = 'input window, operand 1, single buffered']
    #allocation6 [shape = 's32[1]{0}', space=sflag, size = 0x4, scoped, tag = 'scoped memory for tpu_custom_call.1']
    #allocation7 [shape = 'u8[4096]{0}', space=vmem, size = 0x1000, scoped, tag = 'output window, operand 0, single buffered']
    %7 = vsyncpa [#allocation3], 0
    %8 = vsyncpa [#allocation6], 0
    %9 = vsyncpa [#allocation4], 0
    // Predicated region
    $region2: #{tpu_custom_call.1} parent=1 // pred_check
      _
    $region3: #{tpu_custom_call.1} parent=1 // pred_check_branch
      %11 = sbr.rel (0) target = $region5
    $region4: #{tpu_custom_call.1} parent=1 // pred_region
      %s13 = ssub.s32 256, 256
      %14 = vsyncadd [#allocation3], %s13
      %s15 = sshll.u32 [#allocation2], 4
      %s16 = int_to_ptr.vmem [resolvable:$true] %s15
      %21 = dma.hbm_to_vmem [thread:$0]  %s0, 256, %s16, [#allocation3], 128, 128, 8
    $region5: #{tpu_custom_call.1} parent=1 // pred_fallthru
      _
    // Predicated region
    $region6: #{tpu_custom_call.1} parent=1 // pred_check
      _
    $region7: #{tpu_custom_call.1} parent=1 // pred_check_branch
      %23 = sbr.rel (0) target = $region9
    $region8: #{tpu_custom_call.1} parent=1 // pred_region
      %s25 = ssub.s32 128, 128
      %26 = vsyncadd [#allocation6], %s25
      %s28 = sshll.u32 [#allocation5], 4
      %s29 = int_to_ptr.vmem [resolvable:$true] %s28
      %31 = dma.hbm_to_vmem [thread:$0]  %s1, 128, %s29, [#allocation6]
    $region9: #{tpu_custom_call.1} parent=1 // pred_fallthru
      _
    // Predicated region
    $region10: #{tpu_custom_call.1} parent=1 // pred_check
      _
    $region11: #{tpu_custom_call.1} parent=1 // pred_check_branch
      %33 = sbr.rel (0) target = $region13
    $region12: #{tpu_custom_call.1} parent=1 // pred_region
      %34 = dma.done [#allocation3], 256
    $region13: #{tpu_custom_call.1} parent=1 // pred_fallthru
      _
    // Predicated region
    $region14: #{tpu_custom_call.1} parent=1 // pred_check
      _
    $region15: #{tpu_custom_call.1} parent=1 // pred_check_branch
      %36 = sbr.rel (0) target = $region17
    $region16: #{tpu_custom_call.1} parent=1 // pred_region
      %37 = dma.done [#allocation6], 128
    $region17: #{tpu_custom_call.1} parent=1 // pred_fallthru
      _
    %v38 = vld [vmem:[#allocation2] sm:$0xff]
    %s39 = scalar_lea.vmem [#allocation2], 8
    %v40 = vld [vmem:[%s39] sm:$0xff]
    %v41 = vsub.f32 %v40, %v38
    %v42 = vmax.f32 %v41, 0.0
    %v43 = vand.u32 2147483647, %v41
    %v44 = vsub.f32 0.0, %v43
    %v45 = vmul.f32 %v44, 1.442695
    %v46 = vpow.pop %v45
    %v47 = vadd.f32 %v46, 1.0
    %v48 = vlog2.pop %v47
    %v49 = vmul.f32 %v48, 0.6931472
    %v50 = vadd.f32 %v42, %v49
    %v51 = vsub.f32 %v41, %v50
    %v52 = vmul.f32 %v51, 1.442695
    %v53 = vpow.pop %v52
    %v54 = vld [vmem:[#allocation5] sm:$0xff]
    %v55 = vcvt.s32.f32 %v54
    %v56 = vsub.f32 1.0, %v53
    %v57 = vmul.f32 %v55, %v56
    %v58 = vsub.f32 1.0, %v55
    %v59 = vmul.f32 %v58, %v53
    %v60 = vadd.f32 %v57, %v59
    %v61 = vmul.f32 %v50, 0.11323331
    %v62 = vmul.f32 %v41, 0.013497742
    %v63 = vsub.f32 %v61, %v62
    %v64 = vmul.f32 %v60, 1.25
    %v65 = vadd.f32 %v63, %v64
    %v66 = vlaneseq
    %v67 = vshrl.u32 %v66, 7
    %v68 = vlaneseq
    %v69 = vand.u32 %v68, 127
    %s70 = smul.u32 0, 1024
    %v71 = vmul.u32 %v67, 128
    %v72 = vstv %s70
    %v73 = vadd.s32 %v72, %v71
    %v74 = vadd.s32 %v73, %v69
    %vm75 = vcmp.lt.s32.totalorder %v74, 8
    %v76 = vsel %vm75, %v65, 0.0
    %v77 = vadd.f32 %v76, 0.0
    %78 = vst [vmem:[#allocation7] sm:$0xff] %v77
    // Predicated region
    $region18: #{tpu_custom_call.1} parent=1 // pred_check
      _
    $region19: #{tpu_custom_call.1} parent=1 // pred_check_branch
      %80 = sbr.rel (0) target = $region21
    $region20: #{tpu_custom_call.1} parent=1 // pred_region
      %s82 = ssub.s32 128, 128
      %83 = vsyncadd [#allocation4], %s82
      %s85 = sshll.u32 [#allocation7], 4
      %s86 = int_to_ptr.vmem [resolvable:$true] %s85
      %88 = dma.vmem_to_hbm [thread:$0]  %s86, 128, %s2, [#allocation4]
    $region21: #{tpu_custom_call.1} parent=1 // pred_fallthru
      _
    // Predicated region
    $region22: #{tpu_custom_call.1} parent=1 // pred_check
      _
    $region23: #{tpu_custom_call.1} parent=1 // pred_check_branch
      %90 = sbr.rel (0) target = $region25
    $region24: #{tpu_custom_call.1} parent=1 // pred_region
      %91 = dma.done [#allocation4], 128
    $region25: #{tpu_custom_call.1} parent=1 // pred_fallthru
      _
    %92 = vsyncpa [#allocation3], 1
    %93 = vsyncpa [#allocation6], 1
    %94 = vsyncpa [#allocation4], 1

</llo_original>
